<compile_context>
chip_gen: v7x
topology: tpu7x:2x2x1
jax: 0.10.0
libtpu: 0.0.40
codegen_flags: <defaults>
</compile_context>

<pallas_src>
import jax
import jax.numpy as jnp
from jax.experimental import pallas as pl
from jax.experimental.pallas import tpu as pltpu


def _tanh_cat_relu_kernel(x_ref, o_ref):
    # x_ref: (B, C*W) full array in VMEM
    # o_ref: (B, 3, C*W) full array in VMEM
    # tanh -> EUP, max -> VALU; different VLIW slots, nothing to optimize here.
    v = jnp.maximum(jnp.tanh(x_ref[...]), jnp.zeros((), x_ref.dtype))
    vv = v[:, None, :]  # (B, 1, C*W) — row-shaped value for sublane-indexed stores
    # Three row-indexed stores (static sublane offsets, zero lane shift).
    o_ref[:, 0:1, :] = vv
    o_ref[:, 1:2, :] = vv
    o_ref[:, 2:3, :] = vv


def model_forward(x):
    """Equivalent of Model.forward for x of shape (B, C, W)."""
    B, C, W = x.shape
    y_shape = (B, 3 * C, W)  # shape of torch.cat((tanh, tanh, tanh), dim=1)

    # Static branch from the PyTorch module, resolved BEFORE building the kernel.
    # For any 3-D input y is rank-3, so it never equals (1, 3) and the relu
    # branch is always taken; kept only for faithfulness to the spec.
    if y_shape == (1, 3):
        # TODO(synk): unreachable for 3-D inputs; would require tanh instead of relu.
        raise AssertionError("unreachable branch for 3-D input")

    cw = C * W
    xf = x.reshape(B, cw)

    out = pl.pallas_call(
        _tanh_cat_relu_kernel,
        out_shape=jax.ShapeDtypeStruct((B, 3, cw), x.dtype),
        # Full-array VMEM specs: no grid, single DMA in / single DMA out.
        in_specs=[pl.BlockSpec(memory_space=pltpu.MemorySpace.VMEM)],
        out_specs=pl.BlockSpec(memory_space=pltpu.MemorySpace.VMEM),
    )(xf)

    # Contiguous (free) reshape: (B, 3, C*W) -> (B, 3*C*W), matching
    # cat(dim=1) followed by view(B, -1).
    return out.reshape(B, 3 * cw)


if __name__ == "__main__":
    key = jax.random.PRNGKey(0)
    x = jax.random.normal(key, (2, 3, 4), dtype=jnp.float32)

    out = model_forward(x)
    out = jax.block_until_ready(out)

    # Sanity check against a pure-JAX reference of the PyTorch forward.
    ref = jnp.maximum(
        jnp.concatenate([jnp.tanh(x)] * 3, axis=1).reshape(x.shape[0], -1), 0.0
    )
    assert out.shape == (2, 36), out.shape
    assert jnp.allclose(out, ref, atol=1e-6), "mismatch vs reference"

    print("KERNEL_OK")
</pallas_src>

<mosaic_0001>
module attributes {stable_mosaic.version = 11 : i64} {
  func.func @_tanh_cat_relu_kernel(%arg0: memref<2x12xf32, #tpu.memory_space<vmem>>, %arg1: memref<2x3x12xf32, #tpu.memory_space<vmem>>) attributes {dimension_semantics = [], scalar_prefetch = 0 : i64, scratch_operands = 0 : i64, tpu.core_type = #tpu.core_type<tc>} {
    %c0 = arith.constant 0 : index
    %c0_0 = arith.constant 0 : index
    %0 = vector.load %arg0[%c0, %c0_0] : memref<2x12xf32, #tpu.memory_space<vmem>>, vector<2x12xf32>
    %1 = math.tanh %0 : vector<2x12xf32>
    %cst = arith.constant 0.000000e+00 : f32
    %2 = vector.broadcast %cst : f32 to vector<2x12xf32>
    %3 = arith.maximumf %1, %2 : vector<2x12xf32>
    %4 = vector.shape_cast %3 : vector<2x12xf32> to vector<2x1x12xf32>
    %c0_1 = arith.constant 0 : index
    %c0_2 = arith.constant 0 : index
    %c0_3 = arith.constant 0 : index
    %5 = vector.load %arg1[%c0_1, %c0_2, %c0_3] : memref<2x3x12xf32, #tpu.memory_space<vmem>>, vector<2x1x12xf32>
    tpu.vector_store %arg1[%c0_1, %c0_2, %c0_3], %4 {strides = array<i32>} : memref<2x3x12xf32, #tpu.memory_space<vmem>>, vector<2x1x12xf32>,
    %c0_4 = arith.constant 0 : index
    %c1 = arith.constant 1 : index
    %c0_5 = arith.constant 0 : index
    %6 = vector.load %arg1[%c0_4, %c1, %c0_5] : memref<2x3x12xf32, #tpu.memory_space<vmem>>, vector<2x1x12xf32>
    tpu.vector_store %arg1[%c0_4, %c1, %c0_5], %4 {strides = array<i32>} : memref<2x3x12xf32, #tpu.memory_space<vmem>>, vector<2x1x12xf32>,
    %c0_6 = arith.constant 0 : index
    %c2 = arith.constant 2 : index
    %c0_7 = arith.constant 0 : index
    %7 = vector.load %arg1[%c0_6, %c2, %c0_7] : memref<2x3x12xf32, #tpu.memory_space<vmem>>, vector<2x1x12xf32>
    tpu.vector_store %arg1[%c0_6, %c2, %c0_7], %4 {strides = array<i32>} : memref<2x3x12xf32, #tpu.memory_space<vmem>>, vector<2x1x12xf32>,
    return
  }
}

</mosaic_0001>

<llo_original>
// kernel: tpu_custom_call.1
$region0: #{tpu_custom_call.1}
  #allocation0 [shape = 'u32[]', space=smem, size = 0x4, offset = 0x4, fixed_abs, tag = 'smem constant byte address 0x4 - core index']
  #allocation1 [shape = 'u32[144,128]{1,0:T(1,128)}', space=vmem, size = 0x12000, scoped, tag = 'internal scratch']
  %s0 = inlined_call_operand.hbm [shape: f32[2,12], index: 0, kind: input, shape index: {}]
  %s1 = inlined_call_operand.vmem [shape: f32[2,3,12], index: 1, kind: output, shape index: {}]
  %s2 = sld [smem:[#allocation0]]
  $region18: #{tpu_custom_call.1} parent=0
    _
  %s4 = ssub.s32 1, %s2
  %s5 = scalar_select 0, %s4, %s2
  $region1: #{tpu_custom_call.1} parent=0
    #allocation2 [shape = 'u8[1024]{0}', space=vmem, size = 0x400, scoped, tag = 'input window, operand 0, single buffered']
    #allocation3 [shape = 's32[1]{0}', space=sflag, size = 0x4, scoped, tag = 'scoped memory for tpu_custom_call.1']
    %6 = vsyncpa [#allocation3], 0
    // Predicated region
    $region2: #{tpu_custom_call.1} parent=1 // pred_check
      _
    $region3: #{tpu_custom_call.1} parent=1 // pred_check_branch
      %8 = sbr.rel (0) target = $region5
    $region4: #{tpu_custom_call.1} parent=1 // pred_region
      %s10 = ssub.s32 32, 32
      %11 = vsyncadd [#allocation3], %s10
      %s13 = sshll.u32 [#allocation2], 4
      %s14 = int_to_ptr.vmem [resolvable:$true] %s13
      %16 = dma.hbm_to_vmem [thread:$0]  %s0, 32, %s14, [#allocation3]
    $region5: #{tpu_custom_call.1} parent=1 // pred_fallthru
      _
    // Predicated region
    $region6: #{tpu_custom_call.1} parent=1 // pred_check
      _
    $region7: #{tpu_custom_call.1} parent=1 // pred_check_branch
      %18 = sbr.rel (0) target = $region9
    $region8: #{tpu_custom_call.1} parent=1 // pred_region
      %19 = dma.done [#allocation3], 32
    $region9: #{tpu_custom_call.1} parent=1 // pred_fallthru
      _
    %v20 = vld [vmem:[#allocation2] sm:$0x3]
    %v21 = vtanh.pop %v20
    %v22 = vmax.f32 %v21, 0.0
    %v25 = vunpack.c.l.s4 1966171168
    %v26 = vunpack.c.0.s8 %v25
    %v27 = vlaneseq
    %v28 = vshrl.u32 %v27, 7
    %v29 = vsub.s32 %v26, %v28
    %v30 = vrot.slane %v22, %v29
    %v31 = vcombine.high %v30, %v30
    %v33 = vunpack.c.l.s4 1966171168
    %v34 = vunpack.c.0.s8 %v33
    %v35 = vlaneseq
    %v36 = vshrl.u32 %v35, 7
    %v37 = vsub.s32 %v34, %v36
    %v38 = vrot.slane %v30, %v37
    %v40 = vunpack.c.l.s4 1966171168
    %v41 = vunpack.c.0.s8 %v40
    %v42 = vlaneseq
    %v43 = vshrl.u32 %v42, 7
    %v44 = vsub.s32 %v41, %v43
    %v45 = vrot.slane %v31, %v44
    %vm48 = vcmask 90112
    %49 = vst.msk [vmem:[%s1] sm:$0x1] %vm48, %v38
    %50 = vst.msk [vmem:[%s1 + $0x4] sm:$0x1] %vm48, %v45
    %51 = vst.msk [vmem:[%s1 + $0x1] sm:$0x1] %vm48, %v38
    %52 = vst.msk [vmem:[%s1 + $0x5] sm:$0x1] %vm48, %v45
    %53 = vst.msk [vmem:[%s1 + $0x2] sm:$0x1] %vm48, %v38
    %54 = vst.msk [vmem:[%s1 + $0x6] sm:$0x1] %vm48, %v45
    // Predicated region
    $region10: #{tpu_custom_call.1} parent=1 // pred_check
      _
    $region11: #{tpu_custom_call.1} parent=1 // pred_check_branch
      %56 = sbr.rel (0) target = $region13
    $region12: #{tpu_custom_call.1} parent=1 // pred_region
      _
    $region13: #{tpu_custom_call.1} parent=1 // pred_fallthru
      _
    // Predicated region
    $region14: #{tpu_custom_call.1} parent=1 // pred_check
      _
    $region15: #{tpu_custom_call.1} parent=1 // pred_check_branch
      %58 = sbr.rel (0) target = $region17
    $region16: #{tpu_custom_call.1} parent=1 // pred_region
      _
    $region17: #{tpu_custom_call.1} parent=1 // pred_fallthru
      _
    %59 = vsyncpa [#allocation3], 1

</llo_original>
